<compile_context>
chip_gen: v5e
topology: v5e:2x2
jax: 0.10.0
libtpu: 0.0.40
codegen_flags: <defaults>
</compile_context>

<pallas_src>
import jax
import jax.numpy as jnp
from jax.experimental import pallas as pl
from jax.experimental.pallas import tpu as pltpu


# Packed-weight buffer layout (rows of a (208, 128) bf16 slab):
#   rows   0:16 , lanes 0:64  -> W_in   (16, 64)
#   rows  16:80 , lanes 0:128 -> W_lr   (64, 128)  == [W_left | W_right]
#   rows  80:208, lanes 0:16  -> W_out  (128, 16)
_W_ROWS = 208
# Packed-bias buffer layout (rows of a (3, 128) f32 slab):
#   row 0, lanes 0:64  -> b_in   (1, 64)
#   row 1, lanes 0:128 -> b_lr   (1, 128) == [b_left | b_right]
#   row 2, lanes 0:16  -> b_out  (1, 16)


# ----------------------------- fused Pallas kernel -----------------------------

def _fused_forward_kernel(x_ref, w_ref, b_ref, o_ref):
    """Whole test_concat forward on one (Mpad, 16) activation slab in VMEM."""
    x = x_ref[...]                                        # (Mpad, 16) bf16

    # Static (zero-cost) slices of the packed weight buffer; all sublane
    # offsets/sizes are multiples of the bf16 (16,128) tile.
    w_in = w_ref[0:16, 0:64]                              # (16, 64)   bf16
    w_lr = w_ref[16:80, :]                                # (64, 128)  bf16
    w_out = w_ref[80:208, 0:16]                           # (128, 16)  bf16

    b = b_ref[...]                                        # (3, 128)   f32
    b_in = b[0:1, 0:64]                                   # (1, 64)
    b_lr = b[1:2, :]                                      # (1, 128)
    b_out = b[2:3, 0:16]                                  # (1, 16)

    # in_conv: 16 -> 64
    s0 = jnp.dot(x, w_in, preferred_element_type=jnp.float32) + b_in
    s0b = s0.astype(jnp.bfloat16)                         # (Mpad, 64)

    # cat(left(s0), right(s0), dim=channel) == s0 @ [W_left | W_right]  (exact)
    lr = jnp.dot(s0b, w_lr, preferred_element_type=jnp.float32) + b_lr
    lrb = lr.astype(jnp.bfloat16)                         # (Mpad, 128)

    # out_conv: 128 -> 16
    out = jnp.dot(lrb, w_out, preferred_element_type=jnp.float32) + b_out
    o_ref[...] = out                                      # (Mpad, 16) f32


# ------------------------------- params / layout --------------------------------

def init_params(key):
    """Deterministic init with the PyTorch module's parameter shapes (OIHW)."""
    def conv(k, cout, cin, scale=0.05):
        kw, kb = jax.random.split(k)
        w = scale * jax.random.normal(kw, (cout, cin, 1, 1), jnp.float32)
        b = scale * jax.random.normal(kb, (cout,), jnp.float32)
        return {"w": w, "b": b}

    keys = jax.random.split(key, 4)
    return {
        "conv_in":    conv(keys[0], 64, 16),    # in_conv
        "conv_left":  conv(keys[1], 64, 64),    # left_paths[0]
        "conv_right": conv(keys[2], 64, 64),    # right_path.conv_b
        "conv_out":   conv(keys[3], 16, 128),   # out_conv (concat: 64 + 64)
    }


def prepare_params(p):
    """One-time (non-jit) conversion to kernel layout.

    * (Cout,Cin,1,1) -> (Cin,Cout) GEMM weights.
    * Concat folded into the weights: W_lr = [W_left | W_right], b_lr likewise.
    * All bf16 weights packed into ONE contiguous (208,128) buffer and all f32
      biases into ONE (3,128) buffer, so the kernel issues only 3 input DMAs.
    """
    def w_gemm(w):
        return jnp.transpose(w[:, :, 0, 0], (1, 0))       # (Cin, Cout) f32

    w_in = w_gemm(p["conv_in"]["w"])                      # (16, 64)
    w_lr = jnp.concatenate([w_gemm(p["conv_left"]["w"]),
                            w_gemm(p["conv_right"]["w"])], axis=1)   # (64, 128)
    w_out = w_gemm(p["conv_out"]["w"])                    # (128, 16)

    wbuf = jnp.zeros((_W_ROWS, 128), jnp.float32)
    wbuf = wbuf.at[0:16, 0:64].set(w_in)
    wbuf = wbuf.at[16:80, :].set(w_lr)
    wbuf = wbuf.at[80:208, 0:16].set(w_out)
    wbuf = wbuf.astype(jnp.bfloat16)

    b_lr = jnp.concatenate([p["conv_left"]["b"], p["conv_right"]["b"]])  # (128,)
    bbuf = jnp.zeros((3, 128), jnp.float32)
    bbuf = bbuf.at[0, 0:64].set(p["conv_in"]["b"])
    bbuf = bbuf.at[1, :].set(b_lr)
    bbuf = bbuf.at[2, 0:16].set(p["conv_out"]["b"])

    return {"wbuf": wbuf, "bbuf": bbuf}


# ---------------------------------- forward -------------------------------------

def test_concat_forward(x_nchw, kp):
    N, C, H, W = x_nchw.shape
    M = N * H * W
    m_pad = ((M + 255) // 256) * 256                      # 196 -> 256

    # NCHW -> (M, C) slab; cast to bf16 BEFORE padding (pad bf16, not f32).
    x = jnp.transpose(x_nchw, (0, 2, 3, 1)).reshape(M, C).astype(jnp.bfloat16)
    x = jnp.pad(x, ((0, m_pad - M), (0, 0)))

    out = pl.pallas_call(
        _fused_forward_kernel,
        out_shape=jax.ShapeDtypeStruct((m_pad, 16), jnp.float32),
        in_specs=[pl.BlockSpec(memory_space=pltpu.MemorySpace.VMEM)] * 3,
        out_specs=pl.BlockSpec(memory_space=pltpu.MemorySpace.VMEM),
    )(x, kp["wbuf"], kp["bbuf"])

    out = out[:M].reshape(N, H, W, 16)
    return jnp.transpose(out, (0, 3, 1, 2))               # back to NCHW


# ------------------------------ pure-JAX reference ------------------------------

def reference_forward(x_nchw, params):
    def conv1x1(x, w, b):
        return jnp.einsum("nchw,oc->nohw", x, w[:, :, 0, 0]) + b[None, :, None, None]

    s0 = conv1x1(x_nchw, params["conv_in"]["w"], params["conv_in"]["b"])
    step1 = conv1x1(s0, params["conv_left"]["w"], params["conv_left"]["b"])
    right = conv1x1(s0, params["conv_right"]["w"], params["conv_right"]["b"])
    step2 = jnp.concatenate([step1, right], axis=1)
    return conv1x1(step2, params["conv_out"]["w"], params["conv_out"]["b"])


# ----------------------------------- main ----------------------------------------

if __name__ == "__main__":
    key = jax.random.PRNGKey(0)
    k_x, k_p = jax.random.split(key)

    # Module's declared input shape: [N=4, C=16, H=7, W=7], NCHW.
    x = jax.random.normal(k_x, (4, 16, 7, 7), jnp.float32)
    params = init_params(k_p)
    kparams = prepare_params(params)                      # one-time layout prep

    fwd = jax.jit(test_concat_forward)
    out = fwd(x, kparams)
    out = jax.block_until_ready(out)

    assert out.shape == (4, 16, 7, 7), out.shape
    assert bool(jnp.all(jnp.isfinite(out)))

    # Numerics check vs f32 reference (bf16 MXU operands -> loose tolerance).
    ref = reference_forward(x, params)
    assert bool(jnp.allclose(out, ref, rtol=5e-2, atol=5e-2)), \
        float(jnp.max(jnp.abs(out - ref)))

    print("KERNEL_OK")
</pallas_src>

<mosaic_0001>
module attributes {stable_mosaic.version = 11 : i64} {
  func.func @_fused_forward_kernel(%arg0: memref<256x16xbf16, #tpu.memory_space<vmem>>, %arg1: memref<208x128xbf16, #tpu.memory_space<vmem>>, %arg2: memref<3x128xf32, #tpu.memory_space<vmem>>, %arg3: memref<256x16xf32, #tpu.memory_space<vmem>>) attributes {dimension_semantics = [], scalar_prefetch = 0 : i64, scratch_operands = 0 : i64, tpu.core_type = #tpu.core_type<tc>} {
    %c0 = arith.constant 0 : index
    %c0_0 = arith.constant 0 : index
    %0 = vector.load %arg0[%c0, %c0_0] : memref<256x16xbf16, #tpu.memory_space<vmem>>, vector<256x16xbf16>
    %c0_1 = arith.constant 0 : index
    %c0_2 = arith.constant 0 : index
    %1 = vector.load %arg1[%c0_1, %c0_2] : memref<208x128xbf16, #tpu.memory_space<vmem>>, vector<16x64xbf16>
    %c16 = arith.constant 16 : index
    %c0_3 = arith.constant 0 : index
    %2 = vector.load %arg1[%c16, %c0_3] : memref<208x128xbf16, #tpu.memory_space<vmem>>, vector<64x128xbf16>
    %c80 = arith.constant 80 : index
    %c0_4 = arith.constant 0 : index
    %3 = vector.load %arg1[%c80, %c0_4] : memref<208x128xbf16, #tpu.memory_space<vmem>>, vector<128x16xbf16>
    %c0_5 = arith.constant 0 : index
    %c0_6 = arith.constant 0 : index
    %4 = vector.load %arg2[%c0_5, %c0_6] : memref<3x128xf32, #tpu.memory_space<vmem>>, vector<3x128xf32>
    %5 = vector.extract_strided_slice %4 {offsets = [0, 0], sizes = [1, 64], strides = [1, 1]} : vector<3x128xf32> to vector<1x64xf32>
    %6 = vector.extract_strided_slice %4 {offsets = [1, 0], sizes = [1, 128], strides = [1, 1]} : vector<3x128xf32> to vector<1x128xf32>
    %7 = vector.extract_strided_slice %4 {offsets = [2, 0], sizes = [1, 16], strides = [1, 1]} : vector<3x128xf32> to vector<1x16xf32>
    %cst = arith.constant dense<0.000000e+00> : vector<256x64xf32>
    %8 = tpu.matmul %0, %1, %cst {dimension_numbers = #tpu.dot_dimension_numbers<[1], [0], [0], [1], [0, 0, 1, 1], [], []>} : vector<256x16xbf16>, vector<16x64xbf16>, vector<256x64xf32> -> vector<256x64xf32>
    %9 = vector.broadcast %5 : vector<1x64xf32> to vector<256x64xf32>
    %10 = arith.addf %8, %9 : vector<256x64xf32>
    %11 = arith.truncf %10 : vector<256x64xf32> to vector<256x64xbf16>
    %cst_7 = arith.constant dense<0.000000e+00> : vector<256x128xf32>
    %12 = tpu.matmul %11, %2, %cst_7 {dimension_numbers = #tpu.dot_dimension_numbers<[1], [0], [0], [1], [0, 0, 1, 1], [], []>} : vector<256x64xbf16>, vector<64x128xbf16>, vector<256x128xf32> -> vector<256x128xf32>
    %13 = vector.broadcast %6 : vector<1x128xf32> to vector<256x128xf32>
    %14 = arith.addf %12, %13 : vector<256x128xf32>
    %15 = arith.truncf %14 : vector<256x128xf32> to vector<256x128xbf16>
    %cst_8 = arith.constant dense<0.000000e+00> : vector<256x16xf32>
    %16 = tpu.matmul %15, %3, %cst_8 {dimension_numbers = #tpu.dot_dimension_numbers<[1], [0], [0], [1], [0, 0, 1, 1], [], []>} : vector<256x128xbf16>, vector<128x16xbf16>, vector<256x16xf32> -> vector<256x16xf32>
    %17 = vector.broadcast %7 : vector<1x16xf32> to vector<256x16xf32>
    %18 = arith.addf %16, %17 : vector<256x16xf32>
    %c0_9 = arith.constant 0 : index
    %c0_10 = arith.constant 0 : index
    %19 = vector.load %arg3[%c0_9, %c0_10] : memref<256x16xf32, #tpu.memory_space<vmem>>, vector<256x16xf32>
    tpu.vector_store %arg3[%c0_9, %c0_10], %18 {strides = array<i32>} : memref<256x16xf32, #tpu.memory_space<vmem>>, vector<256x16xf32>,
    return
  }
}

</mosaic_0001>

<llo_original>
// kernel: test_concat_forward.1
$region0: #{test_concat_forward.1}
  #allocation0 [shape = 'u32[]', space=smem, size = 0x4, offset = 0x4, fixed_abs, tag = 'smem constant byte address 0x4 - core index']
  #allocation1 [shape = 'u32[72,128]{1,0:T(1,128)}', space=vmem, size = 0x9000, scoped, tag = 'internal scratch']
  %s0 = inlined_call_operand.vmem [shape: bf16[256,16], index: 0, kind: input, shape index: {}]
  %s1 = inlined_call_operand.vmem [shape: bf16[208,128], index: 1, kind: input, shape index: {}]
  %s2 = inlined_call_operand.vmem [shape: f32[3,128], index: 2, kind: input, shape index: {}]
  %s3 = inlined_call_operand.vmem [shape: f32[256,16], index: 3, kind: output, shape index: {}]
  %s4 = sld [smem:[#allocation0]]
  $region22: #{test_concat_forward.1} parent=0
    _
  %s6 = ssub.s32 1, %s4
  %s7 = scalar_select 0, %s6, %s4
  // Predicated region
  $region2: #{test_concat_forward.1} parent=0 // pred_check
    _
  $region3: #{test_concat_forward.1} parent=0 // pred_check_branch
    %9 = sbr.rel (0) target = $region5
  $region4: #{test_concat_forward.1} parent=0 // pred_region
    _
  $region5: #{test_concat_forward.1} parent=0 // pred_fallthru
    _
  // Predicated region
  $region6: #{test_concat_forward.1} parent=0 // pred_check
    _
  $region7: #{test_concat_forward.1} parent=0 // pred_check_branch
    %11 = sbr.rel (0) target = $region9
  $region8: #{test_concat_forward.1} parent=0 // pred_region
    _
  $region9: #{test_concat_forward.1} parent=0 // pred_fallthru
    _
  // Predicated region
  $region10: #{test_concat_forward.1} parent=0 // pred_check
    _
  $region11: #{test_concat_forward.1} parent=0 // pred_check_branch
    %13 = sbr.rel (0) target = $region13
  $region12: #{test_concat_forward.1} parent=0 // pred_region
    _
  $region13: #{test_concat_forward.1} parent=0 // pred_fallthru
    _
  %v15 = vld [vmem:[%s0] sm:$0xf]
  %v16 = vld [vmem:[%s0 + $0x4] sm:$0xf]
  %v17 = vld [vmem:[%s0 + $0x8] sm:$0xf]
  %v18 = vld [vmem:[%s0 + $0xc] sm:$0xf]
  %v19 = vld [vmem:[%s0 + $0x10] sm:$0xf]
  %v20 = vld [vmem:[%s0 + $0x14] sm:$0xf]
  %v21 = vld [vmem:[%s0 + $0x18] sm:$0xf]
  %v22 = vld [vmem:[%s0 + $0x1c] sm:$0xf]
  %v23 = vld [vmem:[%s0 + $0x20] sm:$0xf]
  %v24 = vld [vmem:[%s0 + $0x24] sm:$0xf]
  %v25 = vld [vmem:[%s0 + $0x28] sm:$0xf]
  %v26 = vld [vmem:[%s0 + $0x2c] sm:$0xf]
  %v27 = vld [vmem:[%s0 + $0x30] sm:$0xf]
  %v28 = vld [vmem:[%s0 + $0x34] sm:$0xf]
  %v29 = vld [vmem:[%s0 + $0x38] sm:$0xf]
  %v30 = vld [vmem:[%s0 + $0x3c] sm:$0xf]
  %v31 = vld [vmem:[%s0 + $0x40] sm:$0xf]
  %v32 = vld [vmem:[%s0 + $0x44] sm:$0xf]
  %v33 = vld [vmem:[%s0 + $0x48] sm:$0xf]
  %v34 = vld [vmem:[%s0 + $0x4c] sm:$0xf]
  %v35 = vld [vmem:[%s0 + $0x50] sm:$0xf]
  %v36 = vld [vmem:[%s0 + $0x54] sm:$0xf]
  %v37 = vld [vmem:[%s0 + $0x58] sm:$0xf]
  %v38 = vld [vmem:[%s0 + $0x5c] sm:$0xf]
  %v39 = vld [vmem:[%s0 + $0x60] sm:$0xf]
  %v40 = vld [vmem:[%s0 + $0x64] sm:$0xf]
  %v41 = vld [vmem:[%s0 + $0x68] sm:$0xf]
  %v42 = vld [vmem:[%s0 + $0x6c] sm:$0xf]
  %v43 = vld [vmem:[%s0 + $0x70] sm:$0xf]
  %v44 = vld [vmem:[%s0 + $0x74] sm:$0xf]
  %v45 = vld [vmem:[%s0 + $0x78] sm:$0xf]
  %v46 = vld [vmem:[%s0 + $0x7c] sm:$0xf]
  %v47 = vld [vmem:[%s1] sm:$0xf]
  %v48 = vld [vmem:[%s1 + $0x4] sm:$0xf]
  %v49 = vld [vmem:[%s1 + $0x8] sm:$0xf]
  %v50 = vld [vmem:[%s1 + $0xc] sm:$0xf]
  %v51 = vld [vmem:[%s1 + $0x10] sm:$0xf]
  %v52 = vld [vmem:[%s1 + $0x14] sm:$0xf]
  %v53 = vld [vmem:[%s1 + $0x18] sm:$0xf]
  %v54 = vld [vmem:[%s1 + $0x1c] sm:$0xf]
  %v55 = vld [vmem:[%s1 + $0x20] sm:$0xf]
  %v56 = vld [vmem:[%s1 + $0x24] sm:$0xf]
  %v57 = vld [vmem:[%s1 + $0x28] sm:$0xf]
  %v58 = vld [vmem:[%s1 + $0x2c] sm:$0xf]
  %v59 = vld [vmem:[%s1 + $0x30] sm:$0xf]
  %v60 = vld [vmem:[%s1 + $0x34] sm:$0xf]
  %v61 = vld [vmem:[%s1 + $0x38] sm:$0xf]
  %v62 = vld [vmem:[%s1 + $0x3c] sm:$0xf]
  %v63 = vld [vmem:[%s1 + $0x40] sm:$0xf]
  %v64 = vld [vmem:[%s1 + $0x44] sm:$0xf]
  %v65 = vld [vmem:[%s1 + $0x48] sm:$0xf]
  %v66 = vld [vmem:[%s1 + $0x4c] sm:$0xf]
  %v67 = vld [vmem:[%s1 + $0x50] sm:$0xf]
  %v68 = vld [vmem:[%s1 + $0x54] sm:$0xf]
  %v69 = vld [vmem:[%s1 + $0x58] sm:$0xf]
  %v70 = vld [vmem:[%s1 + $0x5c] sm:$0xf]
  %v71 = vld [vmem:[%s1 + $0x60] sm:$0xf]
  %v72 = vld [vmem:[%s1 + $0x64] sm:$0xf]
  %v73 = vld [vmem:[%s2] sm:$0x7]
  %v74 = vperm.slane %v73, 0
  %v107 = vunpack.c.l.b16 %v15
  %v108 = vunpack.c.l.b16 %v16
  %v109 = vunpack.c.l.b16 %v17
  %v110 = vunpack.c.l.b16 %v18
  %v111 = vunpack.c.l.b16 %v19
  %v112 = vunpack.c.l.b16 %v20
  %v113 = vunpack.c.l.b16 %v21
  %v114 = vunpack.c.l.b16 %v22
  %v115 = vunpack.c.l.b16 %v23
  %v116 = vunpack.c.l.b16 %v24
  %v117 = vunpack.c.l.b16 %v25
  %v118 = vunpack.c.l.b16 %v26
  %v119 = vunpack.c.l.b16 %v27
  %v120 = vunpack.c.l.b16 %v28
  %v121 = vunpack.c.l.b16 %v29
  %v122 = vunpack.c.l.b16 %v30
  %v123 = vunpack.c.l.b16 %v31
  %v124 = vunpack.c.l.b16 %v32
  %v125 = vunpack.c.l.b16 %v33
  %v126 = vunpack.c.l.b16 %v34
  %v127 = vunpack.c.l.b16 %v35
  %v128 = vunpack.c.l.b16 %v36
  %v129 = vunpack.c.l.b16 %v37
  %v130 = vunpack.c.l.b16 %v38
  %v131 = vunpack.c.l.b16 %v39
  %v132 = vunpack.c.l.b16 %v40
  %v133 = vunpack.c.l.b16 %v41
  %v134 = vunpack.c.l.b16 %v42
  %v135 = vunpack.c.l.b16 %v43
  %v136 = vunpack.c.l.b16 %v44
  %v137 = vunpack.c.l.b16 %v45
  %v138 = vunpack.c.l.b16 %v46
  %v139 = vpack.c.b16 %v108, %v107
  %v140 = vpack.c.b16 %v110, %v109
  %v141 = vpack.c.b16 %v112, %v111
  %v142 = vpack.c.b16 %v114, %v113
  %v143 = vpack.c.b16 %v116, %v115
  %v144 = vpack.c.b16 %v118, %v117
  %v145 = vpack.c.b16 %v120, %v119
  %v146 = vpack.c.b16 %v122, %v121
  %v147 = vpack.c.b16 %v124, %v123
  %v148 = vpack.c.b16 %v126, %v125
  %v149 = vpack.c.b16 %v128, %v127
  %v150 = vpack.c.b16 %v130, %v129
  %v151 = vpack.c.b16 %v132, %v131
  %v152 = vpack.c.b16 %v134, %v133
  %v153 = vpack.c.b16 %v136, %v135
  %v154 = vpack.c.b16 %v138, %v137
  %v157 = vunpack.c.l.b16 %v47
  %v158 = vunpack.c.l.b16 %v48
  %v159 = vpack.c.b16 %v158, %v157
  %vm161 = vcmask 130048
  %v163 = vsel %vm161, %v139, 0
  %v166 = vsel %vm161, %v140, 0
  %v169 = vsel %vm161, %v141, 0
  %v172 = vsel %vm161, %v142, 0
  %v175 = vsel %vm161, %v143, 0
  %v178 = vsel %vm161, %v144, 0
  %v181 = vsel %vm161, %v145, 0
  %v184 = vsel %vm161, %v146, 0
  %v187 = vsel %vm161, %v147, 0
  %v190 = vsel %vm161, %v148, 0
  %v193 = vsel %vm161, %v149, 0
  %v196 = vsel %vm161, %v150, 0
  %v199 = vsel %vm161, %v151, 0
  %v202 = vsel %vm161, %v152, 0
  %v205 = vsel %vm161, %v153, 0
  %v208 = vsel %vm161, %v154, 0
  %210 = vmatpush.bf16.msra.mxu0 0
  %211 = vmatpush.bf16.msra.mxu0 0
  %212 = vmatpush.bf16.msra.mxu0 0
  %213 = vmatpush.bf16.msra.mxu0 0
  %214 = vmatpush.bf16.msra.mxu0 0
  %215 = vmatpush.bf16.msra.mxu0 0
  %216 = vmatpush.bf16.msra.mxu0 0
  %217 = vmatpush.bf16.msra.mxu0 %v159
  %218 = vmatmul.bf16.gmra.mxu0 %v163
  %v219 = vpop.f32.mrf.mxu0
  %v220 = vadd.f32 %v74, %v219
  %v221 = vpop.f32.mrf.mxu0
  %v222 = vadd.f32 %v74, %v221
  %223 = vmatmul.bf16.gmra.mxu0 %v166
  %v224 = vpop.f32.mrf.mxu0
  %v225 = vadd.f32 %v74, %v224
  %v226 = vpop.f32.mrf.mxu0
  %v227 = vadd.f32 %v74, %v226
  %228 = vmatmul.bf16.gmra.mxu0 %v169
  %v229 = vpop.f32.mrf.mxu0
  %v230 = vadd.f32 %v74, %v229
  %v231 = vpop.f32.mrf.mxu0
  %v232 = vadd.f32 %v74, %v231
  %233 = vmatmul.bf16.gmra.mxu0 %v172
  %v234 = vpop.f32.mrf.mxu0
  %v235 = vadd.f32 %v74, %v234
  %v236 = vpop.f32.mrf.mxu0
  %v237 = vadd.f32 %v74, %v236
  %238 = vmatmul.bf16.gmra.mxu0 %v175
  %v239 = vpop.f32.mrf.mxu0
  %v240 = vadd.f32 %v74, %v239
  %v241 = vpop.f32.mrf.mxu0
  %v242 = vadd.f32 %v74, %v241
  %243 = vmatmul.bf16.gmra.mxu0 %v178
  %v244 = vpop.f32.mrf.mxu0
  %v245 = vadd.f32 %v74, %v244
  %v246 = vpop.f32.mrf.mxu0
  %v247 = vadd.f32 %v74, %v246
  %248 = vmatmul.bf16.gmra.mxu0 %v181
  %v249 = vpop.f32.mrf.mxu0
  %v250 = vadd.f32 %v74, %v249
  %v251 = vpop.f32.mrf.mxu0
  %v252 = vadd.f32 %v74, %v251
  %253 = vmatmul.bf16.gmra.mxu0 %v184
  %v254 = vpop.f32.mrf.mxu0
  %v255 = vadd.f32 %v74, %v254
  %v256 = vpop.f32.mrf.mxu0
  %v257 = vadd.f32 %v74, %v256
  %258 = vmatmul.bf16.gmra.mxu0 %v187
  %v259 = vpop.f32.mrf.mxu0
  %v260 = vadd.f32 %v74, %v259
  %v261 = vpop.f32.mrf.mxu0
  %v262 = vadd.f32 %v74, %v261
  %263 = vmatmul.bf16.gmra.mxu0 %v190
  %v264 = vpop.f32.mrf.mxu0
  %v265 = vadd.f32 %v74, %v264
  %v266 = vpop.f32.mrf.mxu0
  %v267 = vadd.f32 %v74, %v266
  %268 = vmatmul.bf16.gmra.mxu0 %v193
  %v269 = vpop.f32.mrf.mxu0
  %v270 = vadd.f32 %v74, %v269
  %v271 = vpop.f32.mrf.mxu0
  %v272 = vadd.f32 %v74, %v271
  %273 = vmatmul.bf16.gmra.mxu0 %v196
  %v274 = vpop.f32.mrf.mxu0
  %v275 = vadd.f32 %v74, %v274
  %v276 = vpop.f32.mrf.mxu0
  %v277 = vadd.f32 %v74, %v276
  %278 = vmatmul.bf16.gmra.mxu0 %v199
  %v279 = vpop.f32.mrf.mxu0
  %v280 = vadd.f32 %v74, %v279
  %v281 = vpop.f32.mrf.mxu0
  %v282 = vadd.f32 %v74, %v281
  %283 = vmatmul.bf16.gmra.mxu0 %v202
  %v284 = vpop.f32.mrf.mxu0
  %v285 = vadd.f32 %v74, %v284
  %v286 = vpop.f32.mrf.mxu0
  %v287 = vadd.f32 %v74, %v286
  %288 = vmatmul.bf16.gmra.mxu0 %v205
  %v289 = vpop.f32.mrf.mxu0
  %v290 = vadd.f32 %v74, %v289
  %v291 = vpop.f32.mrf.mxu0
  %v292 = vadd.f32 %v74, %v291
  %293 = vmatmul.bf16.gmra.mxu0 %v208
  %v294 = vpop.f32.mrf.mxu0
  %v295 = vadd.f32 %v74, %v294
  %v296 = vpop.f32.mrf.mxu0
  %v297 = vadd.f32 %v74, %v296
  %298 = vdwg.mxu0
  %v299 = vpack.c.bf16 %v222, %v220
  %v300 = vpack.c.bf16 %v227, %v225
  %v301 = vpack.c.bf16 %v232, %v230
  %v302 = vpack.c.bf16 %v237, %v235
  %v303 = vpack.c.bf16 %v242, %v240
  %v304 = vpack.c.bf16 %v247, %v245
  %v305 = vpack.c.bf16 %v252, %v250
  %v306 = vpack.c.bf16 %v257, %v255
  %v307 = vpack.c.bf16 %v262, %v260
  %v308 = vpack.c.bf16 %v267, %v265
  %v309 = vpack.c.bf16 %v272, %v270
  %v310 = vpack.c.bf16 %v277, %v275
  %v311 = vpack.c.bf16 %v282, %v280
  %v312 = vpack.c.bf16 %v287, %v285
  %v313 = vpack.c.bf16 %v292, %v290
  %v314 = vpack.c.bf16 %v297, %v295
  %v315 = vperm.slane %v73, 1
  %v324 = vunpack.c.l.b16 %v49
  %v325 = vunpack.c.l.b16 %v50
  %v326 = vunpack.c.l.b16 %v51
  %v327 = vunpack.c.l.b16 %v52
  %v328 = vunpack.c.l.b16 %v53
  %v329 = vunpack.c.l.b16 %v54
  %v330 = vunpack.c.l.b16 %v55
  %v331 = vunpack.c.l.b16 %v56
  %v332 = vpack.c.b16 %v325, %v324
  %v333 = vpack.c.b16 %v327, %v326
  %v334 = vpack.c.b16 %v329, %v328
  %v335 = vpack.c.b16 %v331, %v330
  %vm340 = vcmask 523264
  %v342 = vsel %vm340, %v299, 0
  %v345 = vsel %vm340, %v300, 0
  %v348 = vsel %vm340, %v301, 0
  %v351 = vsel %vm340, %v302, 0
  %v354 = vsel %vm340, %v303, 0
  %v357 = vsel %vm340, %v304, 0
  %v360 = vsel %vm340, %v305, 0
  %v363 = vsel %vm340, %v306, 0
  %v366 = vsel %vm340, %v307, 0
  %v369 = vsel %vm340, %v308, 0
  %v372 = vsel %vm340, %v309, 0
  %v375 = vsel %vm340, %v310, 0
  %v378 = vsel %vm340, %v311, 0
  %v381 = vsel %vm340, %v312, 0
  %v384 = vsel %vm340, %v313, 0
  %v387 = vsel %vm340, %v314, 0
  %389 = vmatpush.bf16.msra.mxu0 0
  %390 = vmatpush.bf16.msra.mxu0 0
  %391 = vmatpush.bf16.msra.mxu0 0
  %392 = vmatpush.bf16.msra.mxu0 0
  %393 = vmatpush.bf16.msra.mxu0 %v335
  %394 = vmatpush.bf16.msra.mxu0 %v334
  %395 = vmatpush.bf16.msra.mxu0 %v333
  %396 = vmatpush.bf16.msra.mxu0 %v332
  %397 = vmatmul.bf16.gmra.mxu0 %v342
  %v398 = vpop.f32.mrf.mxu0
  %v399 = vadd.f32 %v315, %v398
  %v400 = vpop.f32.mrf.mxu0
  %v401 = vadd.f32 %v315, %v400
  %402 = vmatmul.bf16.gmra.mxu0 %v345
  %v403 = vpop.f32.mrf.mxu0
  %v404 = vadd.f32 %v315, %v403
  %v405 = vpop.f32.mrf.mxu0
  %v406 = vadd.f32 %v315, %v405
  %407 = vmatmul.bf16.gmra.mxu0 %v348
  %v408 = vpop.f32.mrf.mxu0
  %v409 = vadd.f32 %v315, %v408
  %v410 = vpop.f32.mrf.mxu0
  %v411 = vadd.f32 %v315, %v410
  %412 = vmatmul.bf16.gmra.mxu0 %v351
  %v413 = vpop.f32.mrf.mxu0
  %v414 = vadd.f32 %v315, %v413
  %v415 = vpop.f32.mrf.mxu0
  %v416 = vadd.f32 %v315, %v415
  %417 = vmatmul.bf16.gmra.mxu0 %v354
  %v418 = vpop.f32.mrf.mxu0
  %v419 = vadd.f32 %v315, %v418
  %v420 = vpop.f32.mrf.mxu0
  %v421 = vadd.f32 %v315, %v420
  %422 = vmatmul.bf16.gmra.mxu0 %v357
  %v423 = vpop.f32.mrf.mxu0
  %v424 = vadd.f32 %v315, %v423
  %v425 = vpop.f32.mrf.mxu0
  %v426 = vadd.f32 %v315, %v425
  %427 = vmatmul.bf16.gmra.mxu0 %v360
  %v428 = vpop.f32.mrf.mxu0
  %v429 = vadd.f32 %v315, %v428
  %v430 = vpop.f32.mrf.mxu0
  %v431 = vadd.f32 %v315, %v430
  %432 = vmatmul.bf16.gmra.mxu0 %v363
  %v433 = vpop.f32.mrf.mxu0
  %v434 = vadd.f32 %v315, %v433
  %v435 = vpop.f32.mrf.mxu0
  %v436 = vadd.f32 %v315, %v435
  %437 = vmatmul.bf16.gmra.mxu0 %v366
  %v438 = vpop.f32.mrf.mxu0
  %v439 = vadd.f32 %v315, %v438
  %v440 = vpop.f32.mrf.mxu0
  %v441 = vadd.f32 %v315, %v440
  %442 = vmatmul.bf16.gmra.mxu0 %v369
  %v443 = vpop.f32.mrf.mxu0
  %v444 = vadd.f32 %v315, %v443
  %v445 = vpop.f32.mrf.mxu0
  %v446 = vadd.f32 %v315, %v445
  %447 = vmatmul.bf16.gmra.mxu0 %v372
  %v448 = vpop.f32.mrf.mxu0
  %v449 = vadd.f32 %v315, %v448
  %v450 = vpop.f32.mrf.mxu0
  %v451 = vadd.f32 %v315, %v450
  %452 = vmatmul.bf16.gmra.mxu0 %v375
  %v453 = vpop.f32.mrf.mxu0
  %v454 = vadd.f32 %v315, %v453
  %v455 = vpop.f32.mrf.mxu0
  %v456 = vadd.f32 %v315, %v455
  %457 = vmatmul.bf16.gmra.mxu0 %v378
  %v458 = vpop.f32.mrf.mxu0
  %v459 = vadd.f32 %v315, %v458
  %v460 = vpop.f32.mrf.mxu0
  %v461 = vadd.f32 %v315, %v460
  %462 = vmatmul.bf16.gmra.mxu0 %v381
  %v463 = vpop.f32.mrf.mxu0
  %v464 = vadd.f32 %v315, %v463
  %v465 = vpop.f32.mrf.mxu0
  %v466 = vadd.f32 %v315, %v465
  %467 = vmatmul.bf16.gmra.mxu0 %v384
  %v468 = vpop.f32.mrf.mxu0
  %v469 = vadd.f32 %v315, %v468
  %v470 = vpop.f32.mrf.mxu0
  %v471 = vadd.f32 %v315, %v470
  %472 = vmatmul.bf16.gmra.mxu0 %v387
  %v473 = vpop.f32.mrf.mxu0
  %v474 = vadd.f32 %v315, %v473
  %v475 = vpop.f32.mrf.mxu0
  %v476 = vadd.f32 %v315, %v475
  %477 = vdwg.mxu0
  %v478 = vpack.c.bf16 %v401, %v399
  %v479 = vpack.c.bf16 %v406, %v404
  %v480 = vpack.c.bf16 %v411, %v409
  %v481 = vpack.c.bf16 %v416, %v414
  %v482 = vpack.c.bf16 %v421, %v419
  %v483 = vpack.c.bf16 %v426, %v424
  %v484 = vpack.c.bf16 %v431, %v429
  %v485 = vpack.c.bf16 %v436, %v434
  %v486 = vpack.c.bf16 %v441, %v439
  %v487 = vpack.c.bf16 %v446, %v444
  %v488 = vpack.c.bf16 %v451, %v449
  %v489 = vpack.c.bf16 %v456, %v454
  %v490 = vpack.c.bf16 %v461, %v459
  %v491 = vpack.c.bf16 %v466, %v464
  %v492 = vpack.c.bf16 %v471, %v469
  %v493 = vpack.c.bf16 %v476, %v474
  %v494 = vperm.slane %v73, 2
  %v511 = vunpack.c.l.b16 %v57
  %v512 = vunpack.c.l.b16 %v58
  %v513 = vunpack.c.l.b16 %v59
  %v514 = vunpack.c.l.b16 %v60
  %v515 = vunpack.c.l.b16 %v61
  %v516 = vunpack.c.l.b16 %v62
  %v517 = vunpack.c.l.b16 %v63
  %v518 = vunpack.c.l.b16 %v64
  %v519 = vunpack.c.l.b16 %v65
  %v520 = vunpack.c.l.b16 %v66
  %v521 = vunpack.c.l.b16 %v67
  %v522 = vunpack.c.l.b16 %v68
  %v523 = vunpack.c.l.b16 %v69
  %v524 = vunpack.c.l.b16 %v70
  %v525 = vunpack.c.l.b16 %v71
  %v526 = vunpack.c.l.b16 %v72
  %v527 = vpack.c.b16 %v512, %v511
  %v528 = vpack.c.b16 %v514, %v513
  %v529 = vpack.c.b16 %v516, %v515
  %v530 = vpack.c.b16 %v518, %v517
  %v531 = vpack.c.b16 %v520, %v519
  %v532 = vpack.c.b16 %v522, %v521
  %v533 = vpack.c.b16 %v524, %v523
  %v534 = vpack.c.b16 %v526, %v525
  %543 = vmatpush.bf16.msra.mxu0 %v534
  %544 = vmatpush.bf16.msra.mxu0 %v533
  %545 = vmatpush.bf16.msra.mxu0 %v532
  %546 = vmatpush.bf16.msra.mxu0 %v531
  %547 = vmatpush.bf16.msra.mxu0 %v530
  %548 = vmatpush.bf16.msra.mxu0 %v529
  %549 = vmatpush.bf16.msra.mxu0 %v528
  %550 = vmatpush.bf16.msra.mxu0 %v527
  %551 = vmatmul.bf16.gmra.mxu0 %v478
  %v552 = vpop.f32.mrf.mxu0
  %v553 = vadd.f32 %v494, %v552
  %v554 = vpop.f32.mrf.mxu0
  %v555 = vadd.f32 %v494, %v554
  %556 = vmatmul.bf16.gmra.mxu0 %v479
  %v557 = vpop.f32.mrf.mxu0
  %v558 = vadd.f32 %v494, %v557
  %v559 = vpop.f32.mrf.mxu0
  %v560 = vadd.f32 %v494, %v559
  %561 = vmatmul.bf16.gmra.mxu0 %v480
  %v562 = vpop.f32.mrf.mxu0
  %v563 = vadd.f32 %v494, %v562
  %v564 = vpop.f32.mrf.mxu0
  %v565 = vadd.f32 %v494, %v564
  %566 = vmatmul.bf16.gmra.mxu0 %v481
  %v567 = vpop.f32.mrf.mxu0
  %v568 = vadd.f32 %v494, %v567
  %v569 = vpop.f32.mrf.mxu0
  %v570 = vadd.f32 %v494, %v569
  %571 = vmatmul.bf16.gmra.mxu0 %v482
  %v572 = vpop.f32.mrf.mxu0
  %v573 = vadd.f32 %v494, %v572
  %v574 = vpop.f32.mrf.mxu0
  %v575 = vadd.f32 %v494, %v574
  %576 = vmatmul.bf16.gmra.mxu0 %v483
  %v577 = vpop.f32.mrf.mxu0
  %v578 = vadd.f32 %v494, %v577
  %v579 = vpop.f32.mrf.mxu0
  %v580 = vadd.f32 %v494, %v579
  %581 = vmatmul.bf16.gmra.mxu0 %v484
  %v582 = vpop.f32.mrf.mxu0
  %v583 = vadd.f32 %v494, %v582
  %v584 = vpop.f32.mrf.mxu0
  %v585 = vadd.f32 %v494, %v584
  %586 = vmatmul.bf16.gmra.mxu0 %v485
  %v587 = vpop.f32.mrf.mxu0
  %v588 = vadd.f32 %v494, %v587
  %v589 = vpop.f32.mrf.mxu0
  %v590 = vadd.f32 %v494, %v589
  %591 = vmatmul.bf16.gmra.mxu0 %v486
  %v592 = vpop.f32.mrf.mxu0
  %v593 = vadd.f32 %v494, %v592
  %v594 = vpop.f32.mrf.mxu0
  %v595 = vadd.f32 %v494, %v594
  %596 = vmatmul.bf16.gmra.mxu0 %v487
  %v597 = vpop.f32.mrf.mxu0
  %v598 = vadd.f32 %v494, %v597
  %v599 = vpop.f32.mrf.mxu0
  %v600 = vadd.f32 %v494, %v599
  %601 = vmatmul.bf16.gmra.mxu0 %v488
  %v602 = vpop.f32.mrf.mxu0
  %v603 = vadd.f32 %v494, %v602
  %v604 = vpop.f32.mrf.mxu0
  %v605 = vadd.f32 %v494, %v604
  %606 = vmatmul.bf16.gmra.mxu0 %v489
  %v607 = vpop.f32.mrf.mxu0
  %v608 = vadd.f32 %v494, %v607
  %v609 = vpop.f32.mrf.mxu0
  %v610 = vadd.f32 %v494, %v609
  %611 = vmatmul.bf16.gmra.mxu0 %v490
  %v612 = vpop.f32.mrf.mxu0
  %v613 = vadd.f32 %v494, %v612
  %v614 = vpop.f32.mrf.mxu0
  %v615 = vadd.f32 %v494, %v614
  %616 = vmatmul.bf16.gmra.mxu0 %v491
  %v617 = vpop.f32.mrf.mxu0
  %v618 = vadd.f32 %v494, %v617
  %v619 = vpop.f32.mrf.mxu0
  %v620 = vadd.f32 %v494, %v619
  %621 = vmatmul.bf16.gmra.mxu0 %v492
  %v622 = vpop.f32.mrf.mxu0
  %v623 = vadd.f32 %v494, %v622
  %v624 = vpop.f32.mrf.mxu0
  %v625 = vadd.f32 %v494, %v624
  %626 = vmatmul.bf16.gmra.mxu0 %v493
  %v627 = vpop.f32.mrf.mxu0
  %v628 = vadd.f32 %v494, %v627
  %v629 = vpop.f32.mrf.mxu0
  %v630 = vadd.f32 %v494, %v629
  %631 = vdwg.mxu0
  %632 = vst.msk [vmem:[%s3] sm:$0xff] %vm161, %v553
  %633 = vst.msk [vmem:[%s3 + $0x8] sm:$0xff] %vm161, %v555
  %634 = vst.msk [vmem:[%s3 + $0x10] sm:$0xff] %vm161, %v558
  %635 = vst.msk [vmem:[%s3 + $0x18] sm:$0xff] %vm161, %v560
  %636 = vst.msk [vmem:[%s3 + $0x20] sm:$0xff] %vm161, %v563
  %637 = vst.msk [vmem:[%s3 + $0x28] sm:$0xff] %vm161, %v565
  %638 = vst.msk [vmem:[%s3 + $0x30] sm:$0xff] %vm161, %v568
  %639 = vst.msk [vmem:[%s3 + $0x38] sm:$0xff] %vm161, %v570
  %640 = vst.msk [vmem:[%s3 + $0x40] sm:$0xff] %vm161, %v573
  %641 = vst.msk [vmem:[%s3 + $0x48] sm:$0xff] %vm161, %v575
  %642 = vst.msk [vmem:[%s3 + $0x50] sm:$0xff] %vm161, %v578
  %643 = vst.msk [vmem:[%s3 + $0x58] sm:$0xff] %vm161, %v580
  %644 = vst.msk [vmem:[%s3 + $0x60] sm:$0xff] %vm161, %v583
  %645 = vst.msk [vmem:[%s3 + $0x68] sm:$0xff] %vm161, %v585
  %646 = vst.msk [vmem:[%s3 + $0x70] sm:$0xff] %vm161, %v588
  %647 = vst.msk [vmem:[%s3 + $0x78] sm:$0xff] %vm161, %v590
  %648 = vst.msk [vmem:[%s3 + $0x80] sm:$0xff] %vm161, %v593
  %649 = vst.msk [vmem:[%s3 + $0x88] sm:$0xff] %vm161, %v595
  %650 = vst.msk [vmem:[%s3 + $0x90] sm:$0xff] %vm161, %v598
  %651 = vst.msk [vmem:[%s3 + $0x98] sm:$0xff] %vm161, %v600
  %652 = vst.msk [vmem:[%s3 + $0xa0] sm:$0xff] %vm161, %v603
  %653 = vst.msk [vmem:[%s3 + $0xa8] sm:$0xff] %vm161, %v605
  %654 = vst.msk [vmem:[%s3 + $0xb0] sm:$0xff] %vm161, %v608
  %655 = vst.msk [vmem:[%s3 + $0xb8] sm:$0xff] %vm161, %v610
  %656 = vst.msk [vmem:[%s3 + $0xc0] sm:$0xff] %vm161, %v613
  %657 = vst.msk [vmem:[%s3 + $0xc8] sm:$0xff] %vm161, %v615
  %658 = vst.msk [vmem:[%s3 + $0xd0] sm:$0xff] %vm161, %v618
  %659 = vst.msk [vmem:[%s3 + $0xd8] sm:$0xff] %vm161, %v620
  %660 = vst.msk [vmem:[%s3 + $0xe0] sm:$0xff] %vm161, %v623
  %661 = vst.msk [vmem:[%s3 + $0xe8] sm:$0xff] %vm161, %v625
  %662 = vst.msk [vmem:[%s3 + $0xf0] sm:$0xff] %vm161, %v628
  %663 = vst.msk [vmem:[%s3 + $0xf8] sm:$0xff] %vm161, %v630
  // Predicated region
  $region14: #{test_concat_forward.1} parent=0 // pred_check
    _
  $region15: #{test_concat_forward.1} parent=0 // pred_check_branch
    %665 = sbr.rel (0) target = $region17
  $region16: #{test_concat_forward.1} parent=0 // pred_region
    _
  $region17: #{test_concat_forward.1} parent=0 // pred_fallthru
    _
  // Predicated region
  $region18: #{test_concat_forward.1} parent=0 // pred_check
    _
  $region19: #{test_concat_forward.1} parent=0 // pred_check_branch
    %667 = sbr.rel (0) target = $region21
  $region20: #{test_concat_forward.1} parent=0 // pred_region
    _
  $region21: #{test_concat_forward.1} parent=0 // pred_fallthru
    _

</llo_original>
